<compile_context>
chip_gen: v7x
topology: tpu7x:2x2x1
jax: 0.10.0
libtpu: 0.0.40
codegen_flags: <defaults>
</compile_context>

<pallas_src>
import functools

import jax
import jax.numpy as jnp
from jax.experimental import pallas as pl
from jax.experimental.pallas import tpu as pltpu


def _mlp_kernel(x_ref, wgu_ref, wd_ref, o_ref, acc_ref, *, ti):
    # x_ref:   (TM, H)      tile of tokens
    # wgu_ref: (H, 2*TI)    fused gate|up column block for I-tile j
    # wd_ref:  (TI, H)      down-projection row block for I-tile j
    # o_ref:   (TM, H)      output tile (written at last j)
    # acc_ref: (TM, H) f32  running down-projection accumulator
    j = pl.program_id(1)

    @pl.when(j == 0)
    def _():
        acc_ref[...] = jnp.zeros_like(acc_ref)

    x = x_ref[...]
    # One fused MXU matmul for gate and up.
    gu = jnp.dot(x, wgu_ref[...], preferred_element_type=jnp.float32)  # (TM, 2*TI)
    gate = gu[:, :ti]
    up = gu[:, ti:]
    h = (gate * jax.nn.sigmoid(gate)) * up                             # SiLU(gate) * up
    acc_ref[...] += jnp.dot(h.astype(wd_ref.dtype), wd_ref[...],
                            preferred_element_type=jnp.float32)

    @pl.when(j == pl.num_programs(1) - 1)
    def _():
        o_ref[...] = acc_ref[...].astype(o_ref.dtype)


def _pick_ti(inter, ti_max=512):
    """Pick an I-tile size: prefer 512/256/128 (lane aligned), else the full I."""
    for cand in (ti_max, 256, 128):
        if cand <= inter and inter % cand == 0:
            return cand
    return inter


def prepare_weights(w_gate_up, w_down, *, ti):
    """One-time (init-style) re-layout of torch weights for the fused kernel.

    w_gate_up: (2*I, H) torch nn.Linear layout (gate rows then up rows)
    w_down:    (H, I)   torch nn.Linear layout
    Returns:
      w_gu: (H, 2*I) where columns [j*2*ti : j*2*ti+ti] are gate tile j and
            [j*2*ti+ti : (j+1)*2*ti] are up tile j.
      w_dn: (I, H)
    """
    inter2, hidden = w_gate_up.shape
    inter = inter2 // 2
    assert inter % ti == 0, "intermediate size must be divisible by the I-tile"
    n_i = inter // ti
    wg = w_gate_up[:inter].reshape(n_i, ti, hidden)
    wu = w_gate_up[inter:].reshape(n_i, ti, hidden)
    w_gu = jnp.concatenate([wg, wu], axis=1)                 # (n_i, 2*ti, H)
    w_gu = jnp.transpose(w_gu, (2, 0, 1)).reshape(hidden, n_i * 2 * ti)  # (H, 2*I)
    w_dn = jnp.transpose(w_down)                             # (I, H)
    return w_gu, w_dn


@functools.partial(jax.jit, static_argnames=("ti", "tm"))
def deepseek_mlp_fused(x, w_gu, w_dn, *, ti, tm=128):
    """Hot path. x: (..., H); w_gu: (H, 2*I) prepared; w_dn: (I, H) prepared."""
    orig_shape = x.shape
    hidden = orig_shape[-1]
    inter, hidden_w = w_dn.shape
    assert hidden_w == hidden
    assert w_gu.shape == (hidden, 2 * inter)
    assert inter % ti == 0
    n_i = inter // ti

    x2d = x.reshape(-1, hidden)
    m = x2d.shape[0]
    m_pad = pl.cdiv(m, tm) * tm
    if m_pad != m:
        x2d = jnp.pad(x2d, ((0, m_pad - m), (0, 0)))

    xsz = x2d.dtype.itemsize
    wgu_sz = w_gu.dtype.itemsize
    wdn_sz = w_dn.dtype.itemsize

    # Rough double-buffered VMEM footprint + headroom; clamp to 64 MiB (v7x).
    vmem_bytes = 2 * (tm * hidden * xsz            # x tile
                      + hidden * 2 * ti * wgu_sz   # fused gate/up block
                      + ti * hidden * wdn_sz       # down block
                      + tm * hidden * xsz)         # out tile
    vmem_bytes += tm * hidden * 4                  # f32 accumulator scratch
    vmem_limit = int(min(max(2 * vmem_bytes, 16 << 20), 64 << 20))

    flops = 6 * m_pad * hidden * inter
    transcendentals = m_pad * inter
    bytes_accessed = (x2d.size * xsz + w_gu.size * wgu_sz
                      + w_dn.size * wdn_sz + m_pad * hidden * xsz)

    out = pl.pallas_call(
        functools.partial(_mlp_kernel, ti=ti),
        out_shape=jax.ShapeDtypeStruct((m_pad, hidden), x.dtype),
        grid_spec=pltpu.PrefetchScalarGridSpec(
            num_scalar_prefetch=0,
            grid=(m_pad // tm, n_i),                       # reduction axis last
            in_specs=[
                pl.BlockSpec((tm, hidden), lambda i, j: (i, 0)),
                pl.BlockSpec((hidden, 2 * ti), lambda i, j: (0, j)),
                pl.BlockSpec((ti, hidden), lambda i, j: (j, 0)),
            ],
            out_specs=pl.BlockSpec((tm, hidden), lambda i, j: (i, 0)),
            scratch_shapes=[pltpu.VMEM((tm, hidden), jnp.float32)],
        ),
        compiler_params=pltpu.CompilerParams(
            dimension_semantics=("parallel", "arbitrary"),
            vmem_limit_bytes=vmem_limit),
        cost_estimate=pl.CostEstimate(
            flops=flops,
            transcendentals=transcendentals,
            bytes_accessed=bytes_accessed),
    )(x2d, w_gu, w_dn)

    if m_pad != m:
        out = out[:m]
    return out.reshape(orig_shape)


def deepseek_mlp(x, w_gate_up, w_down, *, tm=128, ti=None):
    """Convenience wrapper taking torch-layout weights.

    NOTE: in a real model, call prepare_weights() once at init time and keep
    calling deepseek_mlp_fused() per forward; doing the re-layout per call
    would re-stream the full weights through HBM.
    """
    inter = w_gate_up.shape[0] // 2
    if ti is None:
        ti = _pick_ti(inter)
    w_gu, w_dn = prepare_weights(w_gate_up, w_down, ti=ti)
    return deepseek_mlp_fused(x, w_gu, w_dn, ti=ti, tm=tm)


def _reference(x, w_gate_up, w_down):
    inter = w_gate_up.shape[0] // 2
    gate_up = x @ w_gate_up.T
    gate, up = gate_up[..., :inter], gate_up[..., inter:]
    h = jax.nn.silu(gate) * up
    return h @ w_down.T


if __name__ == "__main__":
    batch, seq, hidden, inter = 2, 8, 32, 64

    key = jax.random.PRNGKey(0)
    kx, kgu, kd = jax.random.split(key, 3)

    x = jax.random.normal(kx, (batch, seq, hidden), dtype=jnp.float32)
    # torch nn.Linear weight layouts: (out_features, in_features)
    w_gate_up = jax.random.normal(kgu, (2 * inter, hidden), dtype=jnp.float32) * 0.05
    w_down = jax.random.normal(kd, (hidden, inter), dtype=jnp.float32) * 0.05

    # "init-time" weight prep (done once), then the fused hot path.
    ti = _pick_ti(inter)                       # -> 64 for this toy size
    w_gu, w_dn = prepare_weights(w_gate_up, w_down, ti=ti)
    w_gu, w_dn = jax.block_until_ready((w_gu, w_dn))

    y = deepseek_mlp_fused(x, w_gu, w_dn, ti=ti, tm=128)
    y = jax.block_until_ready(y)

    y_ref = _reference(x, w_gate_up, w_down)
    assert y.shape == x.shape
    assert jnp.allclose(y, y_ref, atol=1e-4, rtol=1e-4), "mismatch vs reference"

    print("KERNEL_OK")
</pallas_src>

<mosaic_0001>
module attributes {stable_mosaic.version = 11 : i64} {
  func.func @_mlp_kernel(%arg0: i32, %arg1: i32, %arg2: memref<128x32xf32, #tpu.memory_space<vmem>>, %arg3: memref<32x128xf32, #tpu.memory_space<vmem>>, %arg4: memref<64x32xf32, #tpu.memory_space<vmem>>, %arg5: memref<128x32xf32, #tpu.memory_space<vmem>>, %arg6: memref<128x32xf32, #tpu.memory_space<vmem>>) attributes {dimension_semantics = [#tpu.dimension_semantics<parallel>, #tpu.dimension_semantics<arbitrary>], iteration_bounds = array<i64: 1, 1>, scalar_prefetch = 0 : i64, scratch_operands = 1 : i64, tpu.core_type = #tpu.core_type<tc>, window_params = [{transform_indices = @transform_0, window_bounds = array<i64: 128, 32>}, {transform_indices = @transform_1, window_bounds = array<i64: 32, 128>}, {transform_indices = @transform_2, window_bounds = array<i64: 64, 32>}, {transform_indices = @transform_3, window_bounds = array<i64: 128, 32>}]} {
    %c0_i32 = arith.constant 0 : i32
    %0 = arith.cmpi eq, %arg1, %c0_i32 : i32
    %1 = arith.extui %0 : i1 to i32
    %c0_i32_0 = arith.constant 0 : i32
    %2 = arith.cmpi ne, %1, %c0_i32_0 : i32
    scf.if %2 {
      %cst_14 = arith.constant 0.000000e+00 : f32
      %23 = vector.broadcast %cst_14 : f32 to vector<128x32xf32>
      %c0_15 = arith.constant 0 : index
      %c0_16 = arith.constant 0 : index
      %24 = vector.load %arg6[%c0_15, %c0_16] : memref<128x32xf32, #tpu.memory_space<vmem>>, vector<128x32xf32>
      tpu.vector_store %arg6[%c0_15, %c0_16], %23 {strides = array<i32>} : memref<128x32xf32, #tpu.memory_space<vmem>>, vector<128x32xf32>,
    } else {
    }
    %c0 = arith.constant 0 : index
    %c0_1 = arith.constant 0 : index
    %3 = vector.load %arg2[%c0, %c0_1] : memref<128x32xf32, #tpu.memory_space<vmem>>, vector<128x32xf32>
    %c0_2 = arith.constant 0 : index
    %c0_3 = arith.constant 0 : index
    %4 = vector.load %arg3[%c0_2, %c0_3] : memref<32x128xf32, #tpu.memory_space<vmem>>, vector<32x128xf32>
    %cst = arith.constant dense<0.000000e+00> : vector<128x128xf32>
    %5 = tpu.matmul %3, %4, %cst {dimension_numbers = #tpu.dot_dimension_numbers<[1], [0], [0], [1], [0, 0, 1, 1], [], []>} : vector<128x32xf32>, vector<32x128xf32>, vector<128x128xf32> -> vector<128x128xf32>
    %6 = vector.extract_strided_slice %5 {offsets = [0, 0], sizes = [128, 64], strides = [1, 1]} : vector<128x128xf32> to vector<128x64xf32>
    %7 = vector.extract_strided_slice %5 {offsets = [0, 64], sizes = [128, 64], strides = [1, 1]} : vector<128x128xf32> to vector<128x64xf32>
    %8 = arith.negf %6 : vector<128x64xf32>
    %9 = math.exp %8 : vector<128x64xf32>
    %cst_4 = arith.constant 1.000000e+00 : f32
    %10 = vector.broadcast %cst_4 : f32 to vector<128x64xf32>
    %11 = arith.addf %10, %9 : vector<128x64xf32>
    %12 = arith.divf %10, %11 : vector<128x64xf32>
    %13 = arith.mulf %6, %12 : vector<128x64xf32>
    %14 = arith.mulf %13, %7 : vector<128x64xf32>
    %c0_5 = arith.constant 0 : index
    %c0_6 = arith.constant 0 : index
    %15 = vector.load %arg6[%c0_5, %c0_6] : memref<128x32xf32, #tpu.memory_space<vmem>>, vector<128x32xf32>
    %c0_7 = arith.constant 0 : index
    %c0_8 = arith.constant 0 : index
    %16 = vector.load %arg4[%c0_7, %c0_8] : memref<64x32xf32, #tpu.memory_space<vmem>>, vector<64x32xf32>
    %cst_9 = arith.constant dense<0.000000e+00> : vector<128x32xf32>
    %17 = tpu.matmul %14, %16, %cst_9 {dimension_numbers = #tpu.dot_dimension_numbers<[1], [0], [0], [1], [0, 0, 1, 1], [], []>} : vector<128x64xf32>, vector<64x32xf32>, vector<128x32xf32> -> vector<128x32xf32>
    %18 = arith.addf %15, %17 : vector<128x32xf32>
    %c0_10 = arith.constant 0 : index
    %c0_11 = arith.constant 0 : index
    %19 = vector.load %arg6[%c0_10, %c0_11] : memref<128x32xf32, #tpu.memory_space<vmem>>, vector<128x32xf32>
    tpu.vector_store %arg6[%c0_10, %c0_11], %18 {strides = array<i32>} : memref<128x32xf32, #tpu.memory_space<vmem>>, vector<128x32xf32>,
    %c0_i32_12 = arith.constant 0 : i32
    %20 = arith.cmpi eq, %arg1, %c0_i32_12 : i32
    %21 = arith.extui %20 : i1 to i32
    %c0_i32_13 = arith.constant 0 : i32
    %22 = arith.cmpi ne, %21, %c0_i32_13 : i32
    scf.if %22 {
      %c0_14 = arith.constant 0 : index
      %c0_15 = arith.constant 0 : index
      %23 = vector.load %arg6[%c0_14, %c0_15] : memref<128x32xf32, #tpu.memory_space<vmem>>, vector<128x32xf32>
      %c0_16 = arith.constant 0 : index
      %c0_17 = arith.constant 0 : index
      %24 = vector.load %arg5[%c0_16, %c0_17] : memref<128x32xf32, #tpu.memory_space<vmem>>, vector<128x32xf32>
      tpu.vector_store %arg5[%c0_16, %c0_17], %23 {strides = array<i32>} : memref<128x32xf32, #tpu.memory_space<vmem>>, vector<128x32xf32>,
    } else {
    }
    return
  }
  func.func @transform_0(%arg0: i32, %arg1: i32) -> (i32, i32) {
    %c0_i32 = arith.constant 0 : i32
    %c0_i32_0 = arith.constant 0 : i32
    return %arg0, %c0_i32 : i32, i32
  }
  func.func @transform_1(%arg0: i32, %arg1: i32) -> (i32, i32) {
    %c0_i32 = arith.constant 0 : i32
    %c0_i32_0 = arith.constant 0 : i32
    return %c0_i32, %arg1 : i32, i32
  }
  func.func @transform_2(%arg0: i32, %arg1: i32) -> (i32, i32) {
    %c0_i32 = arith.constant 0 : i32
    %c0_i32_0 = arith.constant 0 : i32
    return %arg1, %c0_i32 : i32, i32
  }
  func.func @transform_3(%arg0: i32, %arg1: i32) -> (i32, i32) {
    %c0_i32 = arith.constant 0 : i32
    %c0_i32_0 = arith.constant 0 : i32
    return %arg0, %c0_i32 : i32, i32
  }
}

</mosaic_0001>

<llo_original>
// kernel: deepseek_mlp_fused.1
$region0: #{deepseek_mlp_fused.1}
  #allocation0 [shape = 'u32[]', space=smem, size = 0x4, offset = 0x4, fixed_abs, tag = 'smem constant byte address 0x4 - core index']
  #allocation1 [shape = 'u32[144,128]{1,0:T(1,128)}', space=vmem, size = 0x12000, scoped, tag = 'internal scratch']
  #allocation2 [shape = 'f32[128,32]{1,0:T(8,128)}', space=vmem, size = 0x10000, scoped, tag = 'scratch operand']
  %s0 = inlined_call_operand.vmem [shape: f32[128,32], index: 0, kind: input, shape index: {}]
  %s1 = inlined_call_operand.vmem [shape: f32[32,128], index: 1, kind: input, shape index: {}]
  %s2 = inlined_call_operand.vmem [shape: f32[64,32], index: 2, kind: input, shape index: {}]
  %s3 = inlined_call_operand.vmem [shape: f32[128,32], index: 3, kind: output, shape index: {}]
  %s4 = sld [smem:[#allocation0]]
  $region30: #{deepseek_mlp_fused.1} parent=0
    _
  %s6 = ssub.s32 1, %s4
  %s7 = scalar_select 0, %s6, %s4
  // Predicated region
  $region2: #{deepseek_mlp_fused.1} parent=0 // pred_check
    _
  $region3: #{deepseek_mlp_fused.1} parent=0 // pred_check_branch
    %9 = sbr.rel (0) target = $region5
  $region4: #{deepseek_mlp_fused.1} parent=0 // pred_region
    _
  $region5: #{deepseek_mlp_fused.1} parent=0 // pred_fallthru
    _
  // Predicated region
  $region6: #{deepseek_mlp_fused.1} parent=0 // pred_check
    _
  $region7: #{deepseek_mlp_fused.1} parent=0 // pred_check_branch
    %11 = sbr.rel (0) target = $region9
  $region8: #{deepseek_mlp_fused.1} parent=0 // pred_region
    _
  $region9: #{deepseek_mlp_fused.1} parent=0 // pred_fallthru
    _
  // Predicated region
  $region10: #{deepseek_mlp_fused.1} parent=0 // pred_check
    _
  $region11: #{deepseek_mlp_fused.1} parent=0 // pred_check_branch
    %13 = sbr.rel (0) target = $region13
  $region12: #{deepseek_mlp_fused.1} parent=0 // pred_region
    _
  $region13: #{deepseek_mlp_fused.1} parent=0 // pred_fallthru
    _
  %p14 = scmp.eq.s32.totalorder 0, 0
  // Predicated region
  $region14: #{deepseek_mlp_fused.1} parent=0 // pred_check
    %p15 = pneg %p14
  $region15: #{deepseek_mlp_fused.1} parent=0 // pred_check_branch
    %17 = sbr.rel (%p15) target = $region17
  $region16: #{deepseek_mlp_fused.1} parent=0 // pred_region
    %vm18 = vcmask 261120
    %19 = vst.msk [vmem:[#allocation2] sm:$0xff] %vm18, 0.0
    %20 = vst.msk [vmem:[#allocation2 + $0x8] sm:$0xff] %vm18, 0.0
    %21 = vst.msk [vmem:[#allocation2 + $0x10] sm:$0xff] %vm18, 0.0
    %22 = vst.msk [vmem:[#allocation2 + $0x18] sm:$0xff] %vm18, 0.0
    %23 = vst.msk [vmem:[#allocation2 + $0x20] sm:$0xff] %vm18, 0.0
    %24 = vst.msk [vmem:[#allocation2 + $0x28] sm:$0xff] %vm18, 0.0
    %25 = vst.msk [vmem:[#allocation2 + $0x30] sm:$0xff] %vm18, 0.0
    %26 = vst.msk [vmem:[#allocation2 + $0x38] sm:$0xff] %vm18, 0.0
    %27 = vst.msk [vmem:[#allocation2 + $0x40] sm:$0xff] %vm18, 0.0
    %28 = vst.msk [vmem:[#allocation2 + $0x48] sm:$0xff] %vm18, 0.0
    %29 = vst.msk [vmem:[#allocation2 + $0x50] sm:$0xff] %vm18, 0.0
    %30 = vst.msk [vmem:[#allocation2 + $0x58] sm:$0xff] %vm18, 0.0
    %31 = vst.msk [vmem:[#allocation2 + $0x60] sm:$0xff] %vm18, 0.0
    %32 = vst.msk [vmem:[#allocation2 + $0x68] sm:$0xff] %vm18, 0.0
    %33 = vst.msk [vmem:[#allocation2 + $0x70] sm:$0xff] %vm18, 0.0
    %34 = vst.msk [vmem:[#allocation2 + $0x78] sm:$0xff] %vm18, 0.0
  $region17: #{deepseek_mlp_fused.1} parent=0 // pred_fallthru
    _
  %v35 = vld [vmem:[%s0] sm:$0xff]
  %v36 = vld [vmem:[%s0 + $0x8] sm:$0xff]
  %v37 = vld [vmem:[%s0 + $0x10] sm:$0xff]
  %v38 = vld [vmem:[%s0 + $0x18] sm:$0xff]
  %v39 = vld [vmem:[%s0 + $0x20] sm:$0xff]
  %v40 = vld [vmem:[%s0 + $0x28] sm:$0xff]
  %v41 = vld [vmem:[%s0 + $0x30] sm:$0xff]
  %v42 = vld [vmem:[%s0 + $0x38] sm:$0xff]
  %v43 = vld [vmem:[%s0 + $0x40] sm:$0xff]
  %v44 = vld [vmem:[%s0 + $0x48] sm:$0xff]
  %v45 = vld [vmem:[%s0 + $0x50] sm:$0xff]
  %v46 = vld [vmem:[%s0 + $0x58] sm:$0xff]
  %v47 = vld [vmem:[%s0 + $0x60] sm:$0xff]
  %v48 = vld [vmem:[%s0 + $0x68] sm:$0xff]
  %v49 = vld [vmem:[%s0 + $0x70] sm:$0xff]
  %v50 = vld [vmem:[%s0 + $0x78] sm:$0xff]
  %v51 = vld [vmem:[%s1] sm:$0xff]
  %v52 = vld [vmem:[%s1 + $0x8] sm:$0xff]
  %v53 = vld [vmem:[%s1 + $0x10] sm:$0xff]
  %v54 = vld [vmem:[%s1 + $0x18] sm:$0xff]
  %vm55 = vcmask 261120
  %v57 = vsel %vm55, %v35, 0
  %v60 = vsel %vm55, %v36, 0
  %v63 = vsel %vm55, %v37, 0
  %v66 = vsel %vm55, %v38, 0
  %v69 = vsel %vm55, %v39, 0
  %v72 = vsel %vm55, %v40, 0
  %v75 = vsel %vm55, %v41, 0
  %v78 = vsel %vm55, %v42, 0
  %v81 = vsel %vm55, %v43, 0
  %v84 = vsel %vm55, %v44, 0
  %v87 = vsel %vm55, %v45, 0
  %v90 = vsel %vm55, %v46, 0
  %v93 = vsel %vm55, %v47, 0
  %v96 = vsel %vm55, %v48, 0
  %v99 = vsel %vm55, %v49, 0
  %v102 = vsel %vm55, %v50, 0
  %104 = vmatprep.subr.mxu0 0.0
  %105 = vmatpush1.msra.mxu0 %v51
  %106 = vmatprep.subr.mxu0 0.0
  %107 = vmatpush1.msra.mxu0 %v52
  %108 = vmatprep.subr.mxu0 0.0
  %109 = vmatpush1.msra.mxu0 %v53
  %110 = vmatprep.subr.mxu0 0.0
  %111 = vmatpush1.msra.mxu0 %v54
  %112 = vmatprep.subr.mxu0 0.0
  %113 = vmatpush1.msra.mxu0 0.0
  %114 = vmatprep.subr.mxu0 0.0
  %115 = vmatpush1.msra.mxu0 0.0
  %116 = vmatprep.subr.mxu0 0.0
  %117 = vmatpush1.msra.mxu0 0.0
  %118 = vmatprep.subr.mxu0 0.0
  %119 = vmatpush1.msra.mxu0 0.0
  %120 = vmatprep.subr.mxu0 0.0
  %121 = vmatpush1.msra.mxu0 0.0
  %122 = vmatprep.subr.mxu0 0.0
  %123 = vmatpush1.msra.mxu0 0.0
  %124 = vmatprep.subr.mxu0 0.0
  %125 = vmatpush1.msra.mxu0 0.0
  %126 = vmatprep.subr.mxu0 0.0
  %127 = vmatpush1.msra.mxu0 0.0
  %128 = vmatprep.subr.mxu0 0.0
  %129 = vmatpush1.msra.mxu0 0.0
  %130 = vmatprep.subr.mxu0 0.0
  %131 = vmatpush1.msra.mxu0 0.0
  %132 = vmatprep.subr.mxu0 0.0
  %133 = vmatpush1.msra.mxu0 0.0
  %134 = vmatprep.subr.mxu0 0.0
  %135 = vmatpush1.msra.mxu0 0.0
  %136 = vmatprep.subr.mxu0 0.0
  %137 = vmatpush1.msra.mxu0 0.0
  %138 = vmatprep.subr.mxu0 0.0
  %139 = vmatpush1.msra.mxu0 0.0
  %140 = vmatprep.subr.mxu0 0.0
  %141 = vmatpush1.msra.mxu0 0.0
  %142 = vmatprep.subr.mxu0 0.0
  %143 = vmatpush1.msra.mxu0 0.0
  %144 = vmatprep.subr.mxu0 0.0
  %145 = vmatpush1.msra.mxu0 0.0
  %146 = vmatprep.subr.mxu0 0.0
  %147 = vmatpush1.msra.mxu0 0.0
  %148 = vmatprep.subr.mxu0 0.0
  %149 = vmatpush1.msra.mxu0 0.0
  %150 = vmatprep.subr.mxu0 0.0
  %151 = vmatpush1.msra.mxu0 0.0
  %152 = vmatprep.subr.mxu0 0.0
  %153 = vmatpush1.msra.mxu0 0.0
  %154 = vmatprep.subr.mxu0 0.0
  %155 = vmatpush1.msra.mxu0 0.0
  %156 = vmatprep.subr.mxu0 0.0
  %157 = vmatpush1.msra.mxu0 0.0
  %158 = vmatprep.subr.mxu0 0.0
  %159 = vmatpush1.msra.mxu0 0.0
  %160 = vmatprep.subr.mxu0 0.0
  %161 = vmatpush1.msra.mxu0 0.0
  %162 = vmatprep.subr.mxu0 0.0
  %163 = vmatpush1.msra.mxu0 0.0
  %164 = vmatprep.subr.mxu0 0.0
  %165 = vmatpush1.msra.mxu0 0.0
  %166 = vmatprep.subr.mxu0 0.0
  %167 = vmatpush1.msra.mxu0 0.0
  %168 = vmatprep.mubr.f32.mxu0 0.0
  %169 = vmatmul.mubr.f32.gmra.mrb[0].mxu0 %v57
  %v170 = vpop.f32.mrb[0].mxu0
  %v171 = vadd.f32 0.0, %v170
  %v172 = vpop.f32.mrb[0].mxu0
  %173 = vmatprep.mubr.f32.mxu0 0.0
  %174 = vmatmul.mubr.f32.gmra.mrb[0].mxu0 %v60
  %v175 = vpop.f32.mrb[0].mxu0
  %v176 = vadd.f32 0.0, %v175
  %v177 = vpop.f32.mrb[0].mxu0
  %178 = vmatprep.mubr.f32.mxu0 0.0
  %179 = vmatmul.mubr.f32.gmra.mrb[0].mxu0 %v63
  %v180 = vpop.f32.mrb[0].mxu0
  %v181 = vadd.f32 0.0, %v180
  %v182 = vpop.f32.mrb[0].mxu0
  %183 = vmatprep.mubr.f32.mxu0 0.0
  %184 = vmatmul.mubr.f32.gmra.mrb[0].mxu0 %v66
  %v185 = vpop.f32.mrb[0].mxu0
  %v186 = vadd.f32 0.0, %v185
  %v187 = vpop.f32.mrb[0].mxu0
  %188 = vmatprep.mubr.f32.mxu0 0.0
  %189 = vmatmul.mubr.f32.gmra.mrb[0].mxu0 %v69
  %v190 = vpop.f32.mrb[0].mxu0
  %v191 = vadd.f32 0.0, %v190
  %v192 = vpop.f32.mrb[0].mxu0
  %193 = vmatprep.mubr.f32.mxu0 0.0
  %194 = vmatmul.mubr.f32.gmra.mrb[0].mxu0 %v72
  %v195 = vpop.f32.mrb[0].mxu0
  %v196 = vadd.f32 0.0, %v195
  %v197 = vpop.f32.mrb[0].mxu0
  %198 = vmatprep.mubr.f32.mxu0 0.0
  %199 = vmatmul.mubr.f32.gmra.mrb[0].mxu0 %v75
  %v200 = vpop.f32.mrb[0].mxu0
  %v201 = vadd.f32 0.0, %v200
  %v202 = vpop.f32.mrb[0].mxu0
  %203 = vmatprep.mubr.f32.mxu0 0.0
  %204 = vmatmul.mubr.f32.gmra.mrb[0].mxu0 %v78
  %v205 = vpop.f32.mrb[0].mxu0
  %v206 = vadd.f32 0.0, %v205
  %v207 = vpop.f32.mrb[0].mxu0
  %208 = vmatprep.mubr.f32.mxu0 0.0
  %209 = vmatmul.mubr.f32.gmra.mrb[0].mxu0 %v81
  %v210 = vpop.f32.mrb[0].mxu0
  %v211 = vadd.f32 0.0, %v210
  %v212 = vpop.f32.mrb[0].mxu0
  %213 = vmatprep.mubr.f32.mxu0 0.0
  %214 = vmatmul.mubr.f32.gmra.mrb[0].mxu0 %v84
  %v215 = vpop.f32.mrb[0].mxu0
  %v216 = vadd.f32 0.0, %v215
  %v217 = vpop.f32.mrb[0].mxu0
  %218 = vmatprep.mubr.f32.mxu0 0.0
  %219 = vmatmul.mubr.f32.gmra.mrb[0].mxu0 %v87
  %v220 = vpop.f32.mrb[0].mxu0
  %v221 = vadd.f32 0.0, %v220
  %v222 = vpop.f32.mrb[0].mxu0
  %223 = vmatprep.mubr.f32.mxu0 0.0
  %224 = vmatmul.mubr.f32.gmra.mrb[0].mxu0 %v90
  %v225 = vpop.f32.mrb[0].mxu0
  %v226 = vadd.f32 0.0, %v225
  %v227 = vpop.f32.mrb[0].mxu0
  %228 = vmatprep.mubr.f32.mxu0 0.0
  %229 = vmatmul.mubr.f32.gmra.mrb[0].mxu0 %v93
  %v230 = vpop.f32.mrb[0].mxu0
  %v231 = vadd.f32 0.0, %v230
  %v232 = vpop.f32.mrb[0].mxu0
  %233 = vmatprep.mubr.f32.mxu0 0.0
  %234 = vmatmul.mubr.f32.gmra.mrb[0].mxu0 %v96
  %v235 = vpop.f32.mrb[0].mxu0
  %v236 = vadd.f32 0.0, %v235
  %v237 = vpop.f32.mrb[0].mxu0
  %238 = vmatprep.mubr.f32.mxu0 0.0
  %239 = vmatmul.mubr.f32.gmra.mrb[0].mxu0 %v99
  %v240 = vpop.f32.mrb[0].mxu0
  %v241 = vadd.f32 0.0, %v240
  %v242 = vpop.f32.mrb[0].mxu0
  %243 = vmatprep.mubr.f32.mxu0 0.0
  %244 = vmatmul.mubr.f32.gmra.mrb[0].mxu0 %v102
  %v245 = vpop.f32.mrb[0].mxu0
  %v246 = vadd.f32 0.0, %v245
  %v247 = vpop.f32.mrb[0].mxu0
  %248 = vdwg.mxu0
  %v249 = vxor.u32 %v171, 2147483648
  %v250 = vxor.u32 %v176, 2147483648
  %v251 = vxor.u32 %v181, 2147483648
  %v252 = vxor.u32 %v186, 2147483648
  %v253 = vxor.u32 %v191, 2147483648
  %v254 = vxor.u32 %v196, 2147483648
  %v255 = vxor.u32 %v201, 2147483648
  %v256 = vxor.u32 %v206, 2147483648
  %v257 = vxor.u32 %v211, 2147483648
  %v258 = vxor.u32 %v216, 2147483648
  %v259 = vxor.u32 %v221, 2147483648
  %v260 = vxor.u32 %v226, 2147483648
  %v261 = vxor.u32 %v231, 2147483648
  %v262 = vxor.u32 %v236, 2147483648
  %v263 = vxor.u32 %v241, 2147483648
  %v264 = vxor.u32 %v246, 2147483648
  %v265 = vmul.f32 %v249, 1.442695
  %v266 = vpow.pop %v265
  %v267 = vmul.f32 %v250, 1.442695
  %v268 = vpow.pop %v267
  %v269 = vmul.f32 %v251, 1.442695
  %v270 = vpow.pop %v269
  %v271 = vmul.f32 %v252, 1.442695
  %v272 = vpow.pop %v271
  %v273 = vmul.f32 %v253, 1.442695
  %v274 = vpow.pop %v273
  %v275 = vmul.f32 %v254, 1.442695
  %v276 = vpow.pop %v275
  %v277 = vmul.f32 %v255, 1.442695
  %v278 = vpow.pop %v277
  %v279 = vmul.f32 %v256, 1.442695
  %v280 = vpow.pop %v279
  %v281 = vmul.f32 %v257, 1.442695
  %v282 = vpow.pop %v281
  %v283 = vmul.f32 %v258, 1.442695
  %v284 = vpow.pop %v283
  %v285 = vmul.f32 %v259, 1.442695
  %v286 = vpow.pop %v285
  %v287 = vmul.f32 %v260, 1.442695
  %v288 = vpow.pop %v287
  %v289 = vmul.f32 %v261, 1.442695
  %v290 = vpow.pop %v289
  %v291 = vmul.f32 %v262, 1.442695
  %v292 = vpow.pop %v291
  %v293 = vmul.f32 %v263, 1.442695
  %v294 = vpow.pop %v293
  %v295 = vmul.f32 %v264, 1.442695
  %v296 = vpow.pop %v295
  %v297 = vadd.f32 %v266, 1.0
  %v298 = vadd.f32 %v268, 1.0
  %v299 = vadd.f32 %v270, 1.0
  %v300 = vadd.f32 %v272, 1.0
  %v301 = vadd.f32 %v274, 1.0
  %v302 = vadd.f32 %v276, 1.0
  %v303 = vadd.f32 %v278, 1.0
  %v304 = vadd.f32 %v280, 1.0
  %v305 = vadd.f32 %v282, 1.0
  %v306 = vadd.f32 %v284, 1.0
  %v307 = vadd.f32 %v286, 1.0
  %v308 = vadd.f32 %v288, 1.0
  %v309 = vadd.f32 %v290, 1.0
  %v310 = vadd.f32 %v292, 1.0
  %v311 = vadd.f32 %v294, 1.0
  %v312 = vadd.f32 %v296, 1.0
  %v313 = vrcp.pop %v297
  %v314 = vmul.f32 1.0, %v313
  %v315 = vrcp.pop %v298
  %v316 = vmul.f32 1.0, %v315
  %v317 = vrcp.pop %v299
  %v318 = vmul.f32 1.0, %v317
  %v319 = vrcp.pop %v300
  %v320 = vmul.f32 1.0, %v319
  %v321 = vrcp.pop %v301
  %v322 = vmul.f32 1.0, %v321
  %v323 = vrcp.pop %v302
  %v324 = vmul.f32 1.0, %v323
  %v325 = vrcp.pop %v303
  %v326 = vmul.f32 1.0, %v325
  %v327 = vrcp.pop %v304
  %v328 = vmul.f32 1.0, %v327
  %v329 = vrcp.pop %v305
  %v330 = vmul.f32 1.0, %v329
  %v331 = vrcp.pop %v306
  %v332 = vmul.f32 1.0, %v331
  %v333 = vrcp.pop %v307
  %v334 = vmul.f32 1.0, %v333
  %v335 = vrcp.pop %v308
  %v336 = vmul.f32 1.0, %v335
  %v337 = vrcp.pop %v309
  %v338 = vmul.f32 1.0, %v337
  %v339 = vrcp.pop %v310
  %v340 = vmul.f32 1.0, %v339
  %v341 = vrcp.pop %v311
  %v342 = vmul.f32 1.0, %v341
  %v343 = vrcp.pop %v312
  %v344 = vmul.f32 1.0, %v343
  %v345 = vmul.f32 %v171, %v314
  %v346 = vmul.f32 %v176, %v316
  %v347 = vmul.f32 %v181, %v318
  %v348 = vmul.f32 %v186, %v320
  %v349 = vmul.f32 %v191, %v322
  %v350 = vmul.f32 %v196, %v324
  %v351 = vmul.f32 %v201, %v326
  %v352 = vmul.f32 %v206, %v328
  %v353 = vmul.f32 %v211, %v330
  %v354 = vmul.f32 %v216, %v332
  %v355 = vmul.f32 %v221, %v334
  %v356 = vmul.f32 %v226, %v336
  %v357 = vmul.f32 %v231, %v338
  %v358 = vmul.f32 %v236, %v340
  %v359 = vmul.f32 %v241, %v342
  %v360 = vmul.f32 %v246, %v344
  %377 = vrot.lane.b32.xlu0 %v171, 64
  %v378 = vpop.permute.xlu0 %377
  %379 = vrot.lane.b32.xlu0 %v176, 64
  %v380 = vpop.permute.xlu0 %379
  %381 = vrot.lane.b32.xlu0 %v181, 64
  %v382 = vpop.permute.xlu0 %381
  %383 = vrot.lane.b32.xlu0 %v186, 64
  %v384 = vpop.permute.xlu0 %383
  %385 = vrot.lane.b32.xlu0 %v191, 64
  %v386 = vpop.permute.xlu0 %385
  %387 = vrot.lane.b32.xlu0 %v196, 64
  %v388 = vpop.permute.xlu0 %387
  %389 = vrot.lane.b32.xlu0 %v201, 64
  %v390 = vpop.permute.xlu0 %389
  %391 = vrot.lane.b32.xlu0 %v206, 64
  %v392 = vpop.permute.xlu0 %391
  %393 = vrot.lane.b32.xlu0 %v211, 64
  %v394 = vpop.permute.xlu0 %393
  %395 = vrot.lane.b32.xlu0 %v216, 64
  %v396 = vpop.permute.xlu0 %395
  %397 = vrot.lane.b32.xlu0 %v221, 64
  %v398 = vpop.permute.xlu0 %397
  %399 = vrot.lane.b32.xlu0 %v226, 64
  %v400 = vpop.permute.xlu0 %399
  %401 = vrot.lane.b32.xlu0 %v231, 64
  %v402 = vpop.permute.xlu0 %401
  %403 = vrot.lane.b32.xlu0 %v236, 64
  %v404 = vpop.permute.xlu0 %403
  %405 = vrot.lane.b32.xlu0 %v241, 64
  %v406 = vpop.permute.xlu0 %405
  %407 = vrot.lane.b32.xlu0 %v246, 64
  %v408 = vpop.permute.xlu0 %407
  %v425 = vmul.f32 %v345, %v378
  %v426 = vmul.f32 %v346, %v380
  %v427 = vmul.f32 %v347, %v382
  %v428 = vmul.f32 %v348, %v384
  %v429 = vmul.f32 %v349, %v386
  %v430 = vmul.f32 %v350, %v388
  %v431 = vmul.f32 %v351, %v390
  %v432 = vmul.f32 %v352, %v392
  %v433 = vmul.f32 %v353, %v394
  %v434 = vmul.f32 %v354, %v396
  %v435 = vmul.f32 %v355, %v398
  %v436 = vmul.f32 %v356, %v400
  %v437 = vmul.f32 %v357, %v402
  %v438 = vmul.f32 %v358, %v404
  %v439 = vmul.f32 %v359, %v406
  %v440 = vmul.f32 %v360, %v408
  %v441 = vld [vmem:[#allocation2] sm:$0xff]
  %v442 = vld [vmem:[#allocation2 + $0x8] sm:$0xff]
  %v443 = vld [vmem:[#allocation2 + $0x10] sm:$0xff]
  %v444 = vld [vmem:[#allocation2 + $0x18] sm:$0xff]
  %v445 = vld [vmem:[#allocation2 + $0x20] sm:$0xff]
  %v446 = vld [vmem:[#allocation2 + $0x28] sm:$0xff]
  %v447 = vld [vmem:[#allocation2 + $0x30] sm:$0xff]
  %v448 = vld [vmem:[#allocation2 + $0x38] sm:$0xff]
  %v449 = vld [vmem:[#allocation2 + $0x40] sm:$0xff]
  %v450 = vld [vmem:[#allocation2 + $0x48] sm:$0xff]
  %v451 = vld [vmem:[#allocation2 + $0x50] sm:$0xff]
  %v452 = vld [vmem:[#allocation2 + $0x58] sm:$0xff]
  %v453 = vld [vmem:[#allocation2 + $0x60] sm:$0xff]
  %v454 = vld [vmem:[#allocation2 + $0x68] sm:$0xff]
  %v455 = vld [vmem:[#allocation2 + $0x70] sm:$0xff]
  %v456 = vld [vmem:[#allocation2 + $0x78] sm:$0xff]
  %v457 = vld [vmem:[%s2] sm:$0xff]
  %v458 = vld [vmem:[%s2 + $0x8] sm:$0xff]
  %v459 = vld [vmem:[%s2 + $0x10] sm:$0xff]
  %v460 = vld [vmem:[%s2 + $0x18] sm:$0xff]
  %v461 = vld [vmem:[%s2 + $0x20] sm:$0xff]
  %v462 = vld [vmem:[%s2 + $0x28] sm:$0xff]
  %v463 = vld [vmem:[%s2 + $0x30] sm:$0xff]
  %v464 = vld [vmem:[%s2 + $0x38] sm:$0xff]
  %vm465 = vcmask 523264
  %v467 = vsel %vm465, %v425, 0
  %v470 = vsel %vm465, %v426, 0
  %v473 = vsel %vm465, %v427, 0
  %v476 = vsel %vm465, %v428, 0
  %v479 = vsel %vm465, %v429, 0
  %v482 = vsel %vm465, %v430, 0
  %v485 = vsel %vm465, %v431, 0
  %v488 = vsel %vm465, %v432, 0
  %v491 = vsel %vm465, %v433, 0
  %v494 = vsel %vm465, %v434, 0
  %v497 = vsel %vm465, %v435, 0
  %v500 = vsel %vm465, %v436, 0
  %v503 = vsel %vm465, %v437, 0
  %v506 = vsel %vm465, %v438, 0
  %v509 = vsel %vm465, %v439, 0
  %v512 = vsel %vm465, %v440, 0
  %514 = vmatprep.subr.mxu0 0.0
  %515 = vmatpush1.msra.mxu0 %v457
  %516 = vmatprep.subr.mxu0 0.0
  %517 = vmatpush1.msra.mxu0 %v458
  %518 = vmatprep.subr.mxu0 0.0
  %519 = vmatpush1.msra.mxu0 %v459
  %520 = vmatprep.subr.mxu0 0.0
  %521 = vmatpush1.msra.mxu0 %v460
  %522 = vmatprep.subr.mxu0 0.0
  %523 = vmatpush1.msra.mxu0 %v461
  %524 = vmatprep.subr.mxu0 0.0
  %525 = vmatpush1.msra.mxu0 %v462
  %526 = vmatprep.subr.mxu0 0.0
  %527 = vmatpush1.msra.mxu0 %v463
  %528 = vmatprep.subr.mxu0 0.0
  %529 = vmatpush1.msra.mxu0 %v464
  %530 = vmatprep.subr.mxu0 0.0
  %531 = vmatpush1.msra.mxu0 0.0
  %532 = vmatprep.subr.mxu0 0.0
  %533 = vmatpush1.msra.mxu0 0.0
  %534 = vmatprep.subr.mxu0 0.0
  %535 = vmatpush1.msra.mxu0 0.0
  %536 = vmatprep.subr.mxu0 0.0
  %537 = vmatpush1.msra.mxu0 0.0
  %538 = vmatprep.subr.mxu0 0.0
  %539 = vmatpush1.msra.mxu0 0.0
  %540 = vmatprep.subr.mxu0 0.0
  %541 = vmatpush1.msra.mxu0 0.0
  %542 = vmatprep.subr.mxu0 0.0
  %543 = vmatpush1.msra.mxu0 0.0
  %544 = vmatprep.subr.mxu0 0.0
  %545 = vmatpush1.msra.mxu0 0.0
  %546 = vmatprep.subr.mxu0 0.0
  %547 = vmatpush1.msra.mxu0 0.0
  %548 = vmatprep.subr.mxu0 0.0
  %549 = vmatpush1.msra.mxu0 0.0
  %550 = vmatprep.subr.mxu0 0.0
  %551 = vmatpush1.msra.mxu0 0.0
  %552 = vmatprep.subr.mxu0 0.0
  %553 = vmatpush1.msra.mxu0 0.0
  %554 = vmatprep.subr.mxu0 0.0
  %555 = vmatpush1.msra.mxu0 0.0
  %556 = vmatprep.subr.mxu0 0.0
  %557 = vmatpush1.msra.mxu0 0.0
  %558 = vmatprep.subr.mxu0 0.0
  %559 = vmatpush1.msra.mxu0 0.0
  %560 = vmatprep.subr.mxu0 0.0
  %561 = vmatpush1.msra.mxu0 0.0
  %562 = vmatprep.subr.mxu0 0.0
  %563 = vmatpush1.msra.mxu0 0.0
  %564 = vmatprep.subr.mxu0 0.0
  %565 = vmatpush1.msra.mxu0 0.0
  %566 = vmatprep.subr.mxu0 0.0
  %567 = vmatpush1.msra.mxu0 0.0
  %568 = vmatprep.subr.mxu0 0.0
  %569 = vmatpush1.msra.mxu0 0.0
  %570 = vmatprep.subr.mxu0 0.0
  %571 = vmatpush1.msra.mxu0 0.0
  %572 = vmatprep.subr.mxu0 0.0
  %573 = vmatpush1.msra.mxu0 0.0
  %574 = vmatprep.subr.mxu0 0.0
  %575 = vmatpush1.msra.mxu0 0.0
  %576 = vmatprep.subr.mxu0 0.0
  %577 = vmatpush1.msra.mxu0 0.0
  %578 = vmatprep.mubr.f32.mxu0 0.0
  %579 = vmatmul.mubr.f32.gmra.mrb[0].mxu0 %v467
  %v580 = vpop.f32.mrb[0].mxu0
  %v581 = vadd.f32 0.0, %v580
  %v582 = vpop.f32.mrb[0].mxu0
  %583 = vmatprep.mubr.f32.mxu0 0.0
  %584 = vmatmul.mubr.f32.gmra.mrb[0].mxu0 %v470
  %v585 = vpop.f32.mrb[0].mxu0
  %v586 = vadd.f32 0.0, %v585
  %v587 = vpop.f32.mrb[0].mxu0
  %588 = vmatprep.mubr.f32.mxu0 0.0
  %589 = vmatmul.mubr.f32.gmra.mrb[0].mxu0 %v473
  %v590 = vpop.f32.mrb[0].mxu0
  %v591 = vadd.f32 0.0, %v590
  %v592 = vpop.f32.mrb[0].mxu0
  %593 = vmatprep.mubr.f32.mxu0 0.0
  %594 = vmatmul.mubr.f32.gmra.mrb[0].mxu0 %v476
  %v595 = vpop.f32.mrb[0].mxu0
  %v596 = vadd.f32 0.0, %v595
  %v597 = vpop.f32.mrb[0].mxu0
  %598 = vmatprep.mubr.f32.mxu0 0.0
  %599 = vmatmul.mubr.f32.gmra.mrb[0].mxu0 %v479
  %v600 = vpop.f32.mrb[0].mxu0
  %v601 = vadd.f32 0.0, %v600
  %v602 = vpop.f32.mrb[0].mxu0
  %603 = vmatprep.mubr.f32.mxu0 0.0
  %604 = vmatmul.mubr.f32.gmra.mrb[0].mxu0 %v482
  %v605 = vpop.f32.mrb[0].mxu0
  %v606 = vadd.f32 0.0, %v605
  %v607 = vpop.f32.mrb[0].mxu0
  %608 = vmatprep.mubr.f32.mxu0 0.0
  %609 = vmatmul.mubr.f32.gmra.mrb[0].mxu0 %v485
  %v610 = vpop.f32.mrb[0].mxu0
  %v611 = vadd.f32 0.0, %v610
  %v612 = vpop.f32.mrb[0].mxu0
  %613 = vmatprep.mubr.f32.mxu0 0.0
  %614 = vmatmul.mubr.f32.gmra.mrb[0].mxu0 %v488
  %v615 = vpop.f32.mrb[0].mxu0
  %v616 = vadd.f32 0.0, %v615
  %v617 = vpop.f32.mrb[0].mxu0
  %618 = vmatprep.mubr.f32.mxu0 0.0
  %619 = vmatmul.mubr.f32.gmra.mrb[0].mxu0 %v491
  %v620 = vpop.f32.mrb[0].mxu0
  %v621 = vadd.f32 0.0, %v620
  %v622 = vpop.f32.mrb[0].mxu0
  %623 = vmatprep.mubr.f32.mxu0 0.0
  %624 = vmatmul.mubr.f32.gmra.mrb[0].mxu0 %v494
  %v625 = vpop.f32.mrb[0].mxu0
  %v626 = vadd.f32 0.0, %v625
  %v627 = vpop.f32.mrb[0].mxu0
  %628 = vmatprep.mubr.f32.mxu0 0.0
  %629 = vmatmul.mubr.f32.gmra.mrb[0].mxu0 %v497
  %v630 = vpop.f32.mrb[0].mxu0
  %v631 = vadd.f32 0.0, %v630
  %v632 = vpop.f32.mrb[0].mxu0
  %633 = vmatprep.mubr.f32.mxu0 0.0
  %634 = vmatmul.mubr.f32.gmra.mrb[0].mxu0 %v500
  %v635 = vpop.f32.mrb[0].mxu0
  %v636 = vadd.f32 0.0, %v635
  %v637 = vpop.f32.mrb[0].mxu0
  %638 = vmatprep.mubr.f32.mxu0 0.0
  %639 = vmatmul.mubr.f32.gmra.mrb[0].mxu0 %v503
  %v640 = vpop.f32.mrb[0].mxu0
  %v641 = vadd.f32 0.0, %v640
  %v642 = vpop.f32.mrb[0].mxu0
  %643 = vmatprep.mubr.f32.mxu0 0.0
  %644 = vmatmul.mubr.f32.gmra.mrb[0].mxu0 %v506
  %v645 = vpop.f32.mrb[0].mxu0
  %v646 = vadd.f32 0.0, %v645
  %v647 = vpop.f32.mrb[0].mxu0
  %648 = vmatprep.mubr.f32.mxu0 0.0
  %649 = vmatmul.mubr.f32.gmra.mrb[0].mxu0 %v509
  %v650 = vpop.f32.mrb[0].mxu0
  %v651 = vadd.f32 0.0, %v650
  %v652 = vpop.f32.mrb[0].mxu0
  %653 = vmatprep.mubr.f32.mxu0 0.0
  %654 = vmatmul.mubr.f32.gmra.mrb[0].mxu0 %v512
  %v655 = vpop.f32.mrb[0].mxu0
  %v656 = vadd.f32 0.0, %v655
  %v657 = vpop.f32.mrb[0].mxu0
  %658 = vdwg.mxu0
  %v659 = vadd.f32 %v441, %v581
  %v660 = vadd.f32 %v442, %v586
  %v661 = vadd.f32 %v443, %v591
  %v662 = vadd.f32 %v444, %v596
  %v663 = vadd.f32 %v445, %v601
  %v664 = vadd.f32 %v446, %v606
  %v665 = vadd.f32 %v447, %v611
  %v666 = vadd.f32 %v448, %v616
  %v667 = vadd.f32 %v449, %v621
  %v668 = vadd.f32 %v450, %v626
  %v669 = vadd.f32 %v451, %v631
  %v670 = vadd.f32 %v452, %v636
  %v671 = vadd.f32 %v453, %v641
  %v672 = vadd.f32 %v454, %v646
  %v673 = vadd.f32 %v455, %v651
  %v674 = vadd.f32 %v456, %v656
  %675 = vst.msk [vmem:[#allocation2] sm:$0xff] %vm55, %v659
  %676 = vst.msk [vmem:[#allocation2 + $0x8] sm:$0xff] %vm55, %v660
  %677 = vst.msk [vmem:[#allocation2 + $0x10] sm:$0xff] %vm55, %v661
  %678 = vst.msk [vmem:[#allocation2 + $0x18] sm:$0xff] %vm55, %v662
  %679 = vst.msk [vmem:[#allocation2 + $0x20] sm:$0xff] %vm55, %v663
  %680 = vst.msk [vmem:[#allocation2 + $0x28] sm:$0xff] %vm55, %v664
  %681 = vst.msk [vmem:[#allocation2 + $0x30] sm:$0xff] %vm55, %v665
  %682 = vst.msk [vmem:[#allocation2 + $0x38] sm:$0xff] %vm55, %v666
  %683 = vst.msk [vmem:[#allocation2 + $0x40] sm:$0xff] %vm55, %v667
  %684 = vst.msk [vmem:[#allocation2 + $0x48] sm:$0xff] %vm55, %v668
  %685 = vst.msk [vmem:[#allocation2 + $0x50] sm:$0xff] %vm55, %v669
  %686 = vst.msk [vmem:[#allocation2 + $0x58] sm:$0xff] %vm55, %v670
  %687 = vst.msk [vmem:[#allocation2 + $0x60] sm:$0xff] %vm55, %v671
  %688 = vst.msk [vmem:[#allocation2 + $0x68] sm:$0xff] %vm55, %v672
  %689 = vst.msk [vmem:[#allocation2 + $0x70] sm:$0xff] %vm55, %v673
  %690 = vst.msk [vmem:[#allocation2 + $0x78] sm:$0xff] %vm55, %v674
  // Predicated region
  $region18: #{deepseek_mlp_fused.1} parent=0 // pred_check
    %p691 = pneg %p14
  $region19: #{deepseek_mlp_fused.1} parent=0 // pred_check_branch
    %693 = sbr.rel (%p691) target = $region21
  $region20: #{deepseek_mlp_fused.1} parent=0 // pred_region
    %v694 = vld [vmem:[#allocation2] sm:$0xff]
    %v695 = vld [vmem:[#allocation2 + $0x8] sm:$0xff]
    %v696 = vld [vmem:[#allocation2 + $0x10] sm:$0xff]
    %v697 = vld [vmem:[#allocation2 + $0x18] sm:$0xff]
    %v698 = vld [vmem:[#allocation2 + $0x20] sm:$0xff]
    %v699 = vld [vmem:[#allocation2 + $0x28] sm:$0xff]
    %v700 = vld [vmem:[#allocation2 + $0x30] sm:$0xff]
    %v701 = vld [vmem:[#allocation2 + $0x38] sm:$0xff]
    %v702 = vld [vmem:[#allocation2 + $0x40] sm:$0xff]
    %v703 = vld [vmem:[#allocation2 + $0x48] sm:$0xff]
    %v704 = vld [vmem:[#allocation2 + $0x50] sm:$0xff]
    %v705 = vld [vmem:[#allocation2 + $0x58] sm:$0xff]
    %v706 = vld [vmem:[#allocation2 + $0x60] sm:$0xff]
    %v707 = vld [vmem:[#allocation2 + $0x68] sm:$0xff]
    %v708 = vld [vmem:[#allocation2 + $0x70] sm:$0xff]
    %v709 = vld [vmem:[#allocation2 + $0x78] sm:$0xff]
    %710 = vst.msk [vmem:[%s3] sm:$0xff] %vm55, %v694
    %711 = vst.msk [vmem:[%s3 + $0x8] sm:$0xff] %vm55, %v695
    %712 = vst.msk [vmem:[%s3 + $0x10] sm:$0xff] %vm55, %v696
    %713 = vst.msk [vmem:[%s3 + $0x18] sm:$0xff] %vm55, %v697
    %714 = vst.msk [vmem:[%s3 + $0x20] sm:$0xff] %vm55, %v698
    %715 = vst.msk [vmem:[%s3 + $0x28] sm:$0xff] %vm55, %v699
    %716 = vst.msk [vmem:[%s3 + $0x30] sm:$0xff] %vm55, %v700
    %717 = vst.msk [vmem:[%s3 + $0x38] sm:$0xff] %vm55, %v701
    %718 = vst.msk [vmem:[%s3 + $0x40] sm:$0xff] %vm55, %v702
    %719 = vst.msk [vmem:[%s3 + $0x48] sm:$0xff] %vm55, %v703
    %720 = vst.msk [vmem:[%s3 + $0x50] sm:$0xff] %vm55, %v704
    %721 = vst.msk [vmem:[%s3 + $0x58] sm:$0xff] %vm55, %v705
    %722 = vst.msk [vmem:[%s3 + $0x60] sm:$0xff] %vm55, %v706
    %723 = vst.msk [vmem:[%s3 + $0x68] sm:$0xff] %vm55, %v707
    %724 = vst.msk [vmem:[%s3 + $0x70] sm:$0xff] %vm55, %v708
    %725 = vst.msk [vmem:[%s3 + $0x78] sm:$0xff] %vm55, %v709
  $region21: #{deepseek_mlp_fused.1} parent=0 // pred_fallthru
    _
  // Predicated region
  $region22: #{deepseek_mlp_fused.1} parent=0 // pred_check
    _
  $region23: #{deepseek_mlp_fused.1} parent=0 // pred_check_branch
    %727 = sbr.rel (0) target = $region25
  $region24: #{deepseek_mlp_fused.1} parent=0 // pred_region
    _
  $region25: #{deepseek_mlp_fused.1} parent=0 // pred_fallthru
    _
  // Predicated region
  $region26: #{deepseek_mlp_fused.1} parent=0 // pred_check
    _
  $region27: #{deepseek_mlp_fused.1} parent=0 // pred_check_branch
    %729 = sbr.rel (0) target = $region29
  $region28: #{deepseek_mlp_fused.1} parent=0 // pred_region
    _
  $region29: #{deepseek_mlp_fused.1} parent=0 // pred_fallthru
    _

</llo_original>
